<compile_context>
chip_gen: v5e
topology: v5e:2x2
jax: 0.10.0
libtpu: 0.0.40
codegen_flags: <defaults>
</compile_context>

<pallas_src>
import functools

import jax
import jax.numpy as jnp
from jax.experimental import pallas as pl
from jax.experimental.pallas import tpu as pltpu


# --------------------------------------------------------------------------- #
# Helpers
# --------------------------------------------------------------------------- #
def _round_up(x, m):
    return ((x + m - 1) // m) * m


def _default_vmem_budget():
    """Generation-aware VMEM budget: ~60% of physical per-core VMEM."""
    try:
        cap = pltpu.get_tpu_info().vmem_capacity_bytes
    except Exception:
        cap = 64 * 1024 * 1024  # conservative fallback (v7x per-TC VMEM)
    return int(cap * 0.6)


def _choose_batch_tile(b, d, k_pad, in_itemsize, out_itemsize,
                       vmem_budget_bytes, granule,
                       target_io_bytes=8 * 1024 * 1024):
    """Batch tile sized by bytes: big enough to amortize per-step overhead,
    small enough to fit the VMEM budget, and split >= 2 ways for v7x megacore."""
    # Resident cost: weights + ||w||^2 (constant index_map, but the default
    # pipeline still reserves double buffers for them).
    fixed = 2 * (k_pad * d * in_itemsize) + 2 * (8 * k_pad * 4)
    # Per batch-row VMEM: double-buffered x + double-buffered out + a few live
    # f32 (TB, K_pad) intermediates + the f32 copy of the x row.
    per_row_vmem = 2 * d * in_itemsize + 2 * k_pad * out_itemsize + 4 * k_pad * 4 + d * 4
    avail = max(vmem_budget_bytes - fixed, per_row_vmem * granule)
    tb_vmem = avail // per_row_vmem

    # Per-step HBM traffic target (x read + out write) -> amortizes ~0.35 us/step.
    per_row_io = d * in_itemsize + k_pad * out_itemsize
    tb_io = max(granule, target_io_bytes // per_row_io)

    tb = min(tb_vmem, tb_io)
    # At least 2 grid steps so both v7x TensorCores get work (no-op on 1-TC chips).
    tb = min(tb, _round_up((b + 1) // 2, granule))
    tb = max(granule, (tb // granule) * granule)
    tb = min(tb, _round_up(b, granule))
    return int(tb)


# --------------------------------------------------------------------------- #
# Kernel
# --------------------------------------------------------------------------- #
def _clusterling_kernel(x_ref, w_ref, w2_ref, o_ref, *, alpha, num_valid_k,
                        mxu_dtype):
    # x_ref : (TB, D)      batch tile
    # w_ref : (K_pad, D)   full (K-padded) cluster-center matrix, resident
    # w2_ref: (1, K_pad)   precomputed ||w_k||^2 (hoisted out of the grid loop)
    # o_ref : (TB, K_pad)  soft-assignment tile (padded columns stored as 0)
    x = x_ref[...]
    w = w_ref[...]
    w2 = w2_ref[...].astype(jnp.float32)                       # (1, K_pad)

    # --- MXU: cross term x @ w^T (contract last dims; f32 accumulate) --------
    xw = jax.lax.dot_general(
        x.astype(mxu_dtype),
        w.astype(mxu_dtype),
        dimension_numbers=(((1,), (1,)), ((), ())),
        preferred_element_type=jnp.float32,
    )                                                           # (TB, K_pad)

    # --- VPU/XLU: per-row squared norm of x (small: O(TB*D)) -----------------
    xf = x.astype(jnp.float32)
    x2 = jnp.sum(xf * xf, axis=1, keepdims=True)                # (TB, 1)

    # Squared distance; clamp tiny negatives from cancellation / bf16 rounding.
    dist = jnp.maximum(x2 + w2 - 2.0 * xw, 0.0)                 # (TB, K_pad)

    inv_alpha = 1.0 / alpha
    power = (alpha + 1.0) / 2.0
    t = 1.0 + dist * inv_alpha                                  # >= 1

    if power == 1.0:
        # alpha == 1.0 (DEC default): a single approx EUP reciprocal.
        q = pl.reciprocal(t, approx=True)
    elif float(2.0 * power).is_integer() and 2.0 * power <= 16.0:
        # (alpha+1) integer: t^(-p) = rsqrt(t)^(2p) -> one EUP rsqrt + cheap
        # VPU multiplies instead of an exp+log pair on the single EUP slot.
        m = int(round(2.0 * power))
        q = jax.lax.integer_pow(jax.lax.rsqrt(t), m)
    else:
        # General alpha: reuse t (log(t)), one log + one exp on the EUP.
        q = jnp.exp(-power * jnp.log(t))

    # Zero the padded cluster columns before the row-sum (padded zero-weight
    # clusters would otherwise contribute 1/(1+||x||^2) to the denominator).
    k_pad = o_ref.shape[-1]
    if num_valid_k != k_pad:
        col = jax.lax.broadcasted_iota(jnp.int32, (1, k_pad), 1)
        q = jnp.where(col < num_valid_k, q, 0.0)

    denom = jnp.sum(q, axis=1, keepdims=True)                   # (TB, 1)
    # Exact reciprocal for the denominator (tiny; avoids compounding approx err).
    o_ref[...] = (q * (1.0 / denom)).astype(o_ref.dtype)


# --------------------------------------------------------------------------- #
# Wrapper
# --------------------------------------------------------------------------- #
def clusterling_forward(
    x,
    weight,
    alpha=1.0,
    *,
    block_b=None,
    mxu_dtype=None,
    vmem_budget_bytes=None,
):
    """Pallas TPU forward pass of ClusterlingLayer.

    x      : (B, D)  inputs
    weight : (K, D)  cluster centers
    returns: (B, K)  row-normalized soft assignments (float32)
    """
    B, D = x.shape
    K, D2 = weight.shape
    assert D == D2, "feature dims must match"

    out_dtype = jnp.float32

    if mxu_dtype is None:
        # bf16 MXU operands (native on v5e/v6e/v7x); f32 accumulate + f32 norms
        # keep the distance accurate. Pass mxu_dtype=jnp.float32 for exact math.
        mxu_dtype = jnp.bfloat16 if x.dtype == jnp.float32 else x.dtype

    if vmem_budget_bytes is None:
        vmem_budget_bytes = _default_vmem_budget()

    # Pad the cluster axis to a multiple of 128: lane-dense output stores and a
    # full MXU N dimension. Weights are parameters -> tiny, batch-independent pad.
    K_pad = _round_up(K, 128)
    weight_p = weight if K_pad == K else jnp.pad(weight, ((0, K_pad - K), (0, 0)))

    # Hoist ||w||^2: computed once, not once per grid step (padded rows -> 0).
    w_f32 = weight_p.astype(jnp.float32)
    w2 = jnp.sum(w_f32 * w_f32, axis=1, keepdims=True).T        # (1, K_pad)

    # Sublane-packing granule for the batch tile: 8 (f32) / 16 (bf16) / 32 (int8).
    itemsize = jnp.dtype(x.dtype).itemsize
    granule = max(8, 32 // max(1, itemsize))

    if block_b is None:
        block_b = _choose_batch_tile(
            B, D, K_pad, itemsize, jnp.dtype(out_dtype).itemsize,
            vmem_budget_bytes, granule,
        )
    block_b = max(granule, (int(block_b) // granule) * granule)
    block_b = min(block_b, _round_up(B, granule))

    # Ragged last block handled by Pallas (no wrapper-side jnp.pad / out[:B]):
    # the math is row-local, padded rows never contaminate real rows, and the
    # out-of-bounds part of the last output block is masked on writeback.
    grid = (pl.cdiv(B, block_b),)

    kernel = functools.partial(
        _clusterling_kernel,
        alpha=float(alpha),
        num_valid_k=K,
        mxu_dtype=mxu_dtype,
    )

    out = pl.pallas_call(
        kernel,
        out_shape=jax.ShapeDtypeStruct((B, K_pad), out_dtype),
        grid=grid,
        in_specs=[
            pl.BlockSpec((block_b, D), lambda i: (i, 0)),       # x tile
            pl.BlockSpec((K_pad, D), lambda i: (0, 0)),         # full weights
            pl.BlockSpec((1, K_pad), lambda i: (0, 0)),         # ||w||^2
        ],
        out_specs=pl.BlockSpec((block_b, K_pad), lambda i: (i, 0)),
        compiler_params=pltpu.CompilerParams(
            dimension_semantics=("parallel",),                  # 2-TC sharding on v7x
            vmem_limit_bytes=int(vmem_budget_bytes),            # same as tile budget
        ),
    )(x, weight_p, w2)

    if K_pad != K:
        out = out[:, :K]
    return out


# --------------------------------------------------------------------------- #
# Pure-JAX reference + init
# --------------------------------------------------------------------------- #
def clusterling_reference(x, weight, alpha=1.0):
    diff = x[:, None, :].astype(jnp.float32) - weight[None, :, :].astype(jnp.float32)
    dist = jnp.sum(diff * diff, axis=2)
    q = 1.0 / (1.0 + dist / alpha)
    q = q ** ((alpha + 1.0) / 2.0)
    return q / jnp.sum(q, axis=1, keepdims=True)


def xavier_uniform(key, shape, dtype=jnp.float32):
    # nn.init.xavier_uniform_ with gain=1: U(-a, a), a = sqrt(6/(fan_in+fan_out))
    fan_out, fan_in = shape
    bound = (6.0 / (fan_in + fan_out)) ** 0.5
    return jax.random.uniform(key, shape, dtype=dtype, minval=-bound, maxval=bound)


# --------------------------------------------------------------------------- #
# Demo / self-test
# --------------------------------------------------------------------------- #
if __name__ == "__main__":
    key = jax.random.PRNGKey(0)
    kx, kw = jax.random.split(key)

    # Small shapes: batch=200 (not a tile multiple -> ragged last block),
    # 32 features, 16 clusters (padded to 128 lanes inside), DEC default alpha.
    B, D, K = 200, 32, 16
    alpha = 1.0

    x = jax.random.normal(kx, (B, D), dtype=jnp.float32)
    weight = xavier_uniform(kw, (K, D))

    ref = clusterling_reference(x, weight, alpha)

    # 1) Explicit tile: exercises ragged last block (200 = 3*64 + 8) + K padding/mask.
    out = jax.block_until_ready(clusterling_forward(x, weight, alpha, block_b=64))
    assert out.shape == (B, K)
    assert jnp.allclose(out, ref, atol=5e-3, rtol=5e-3), "mismatch vs reference"
    assert jnp.allclose(jnp.sum(out, axis=1), jnp.ones((B,)), atol=1e-3)

    # 2) Auto tile chooser + generation-aware VMEM budget path.
    out2 = jax.block_until_ready(clusterling_forward(x, weight, alpha))
    assert out2.shape == (B, K)
    assert jnp.allclose(out2, ref, atol=5e-3, rtol=5e-3), "mismatch (auto tile)"

    # 3) General alpha (rsqrt + integer-pow branch), exact-f32 MXU operands.
    out3 = jax.block_until_ready(
        clusterling_forward(x, weight, alpha=2.0, block_b=64, mxu_dtype=jnp.float32)
    )
    ref3 = clusterling_reference(x, weight, alpha=2.0)
    assert jnp.allclose(out3, ref3, atol=5e-3, rtol=5e-3), "mismatch (alpha=2)"

    print("KERNEL_OK")
</pallas_src>

<mosaic_0001>
module attributes {stable_mosaic.version = 11 : i64} {
  func.func @_clusterling_kernel(%arg0: i32, %arg1: memref<64x32xf32, #tpu.memory_space<vmem>>, %arg2: memref<128x32xf32, #tpu.memory_space<vmem>>, %arg3: memref<1x128xf32, #tpu.memory_space<vmem>>, %arg4: memref<64x128xf32, #tpu.memory_space<vmem>>) attributes {dimension_semantics = [#tpu.dimension_semantics<parallel>], iteration_bounds = array<i64: 4>, scalar_prefetch = 0 : i64, scratch_operands = 0 : i64, tpu.core_type = #tpu.core_type<tc>, window_params = [{transform_indices = @transform_0, window_bounds = array<i64: 64, 32>}, {pipeline_mode = #tpu.pipeline_mode<synchronous>, transform_indices = @transform_1, window_bounds = array<i64: 128, 32>}, {pipeline_mode = #tpu.pipeline_mode<synchronous>, transform_indices = @transform_2, window_bounds = array<i64: 1, 128>}, {transform_indices = @transform_3, window_bounds = array<i64: 64, 128>}]} {
    %c0 = arith.constant 0 : index
    %c0_0 = arith.constant 0 : index
    %0 = vector.load %arg1[%c0, %c0_0] : memref<64x32xf32, #tpu.memory_space<vmem>>, vector<64x32xf32>
    %c0_1 = arith.constant 0 : index
    %c0_2 = arith.constant 0 : index
    %1 = vector.load %arg2[%c0_1, %c0_2] : memref<128x32xf32, #tpu.memory_space<vmem>>, vector<128x32xf32>
    %c0_3 = arith.constant 0 : index
    %c0_4 = arith.constant 0 : index
    %2 = vector.load %arg3[%c0_3, %c0_4] : memref<1x128xf32, #tpu.memory_space<vmem>>, vector<1x128xf32>
    %3 = arith.truncf %0 : vector<64x32xf32> to vector<64x32xbf16>
    %4 = arith.truncf %1 : vector<128x32xf32> to vector<128x32xbf16>
    %cst = arith.constant dense<0.000000e+00> : vector<64x128xf32>
    %5 = tpu.matmul %3, %4, %cst {dimension_numbers = #tpu.dot_dimension_numbers<[1], [1], [0], [0], [0, 0, 1, 0], [], []>} : vector<64x32xbf16>, vector<128x32xbf16>, vector<64x128xf32> -> vector<64x128xf32>
    %6 = arith.mulf %0, %0 : vector<64x32xf32>
    %cst_5 = arith.constant dense<0.000000e+00> : vector<64xf32>
    %7 = vector.multi_reduction <add>, %6, %cst_5 [1] : vector<64x32xf32> to vector<64xf32>
    %8 = vector.shape_cast %7 : vector<64xf32> to vector<64x1xf32>
    %9 = vector.broadcast %8 : vector<64x1xf32> to vector<64x128xf32>
    %10 = vector.broadcast %2 : vector<1x128xf32> to vector<64x128xf32>
    %11 = arith.addf %9, %10 : vector<64x128xf32>
    %cst_6 = arith.constant 2.000000e+00 : f32
    %12 = vector.broadcast %cst_6 : f32 to vector<64x128xf32>
    %13 = arith.mulf %12, %5 : vector<64x128xf32>
    %14 = arith.subf %11, %13 : vector<64x128xf32>
    %cst_7 = arith.constant 0.000000e+00 : f32
    %15 = vector.broadcast %cst_7 : f32 to vector<64x128xf32>
    %16 = arith.maximumf %14, %15 : vector<64x128xf32>
    %cst_8 = arith.constant 1.000000e+00 : f32
    %17 = vector.broadcast %cst_8 : f32 to vector<64x128xf32>
    %18 = arith.mulf %16, %17 : vector<64x128xf32>
    %cst_9 = arith.constant 1.000000e+00 : f32
    %19 = vector.broadcast %cst_9 : f32 to vector<64x128xf32>
    %20 = arith.addf %19, %18 : vector<64x128xf32>
    %21 = tpu.reciprocal %20 {approx = true} : vector<64x128xf32> -> vector<64x128xf32>
    %22 = tpu.iota {dimensions = array<i32: 1>} : vector<1x128xi32>
    %c16_i32 = arith.constant 16 : i32
    %23 = vector.broadcast %c16_i32 : i32 to vector<1x128xi32>
    %24 = arith.cmpi slt, %22, %23 : vector<1x128xi32>
    %cst_10 = arith.constant 0.000000e+00 : f32
    %25 = vector.shape_cast %24 : vector<1x128xi1> to vector<1x128xi1>
    %26 = vector.broadcast %25 : vector<1x128xi1> to vector<64x128xi1>
    %27 = vector.broadcast %cst_10 : f32 to vector<64x128xf32>
    %28 = arith.select %26, %21, %27 : vector<64x128xi1>, vector<64x128xf32>
    %cst_11 = arith.constant dense<0.000000e+00> : vector<64xf32>
    %29 = vector.multi_reduction <add>, %28, %cst_11 [1] : vector<64x128xf32> to vector<64xf32>
    %30 = vector.shape_cast %29 : vector<64xf32> to vector<64x1xf32>
    %cst_12 = arith.constant 1.000000e+00 : f32
    %31 = vector.broadcast %cst_12 : f32 to vector<64x1xf32>
    %32 = arith.divf %31, %30 : vector<64x1xf32>
    %33 = vector.broadcast %32 : vector<64x1xf32> to vector<64x128xf32>
    %34 = arith.mulf %28, %33 : vector<64x128xf32>
    %c0_13 = arith.constant 0 : index
    %c0_14 = arith.constant 0 : index
    %35 = vector.load %arg4[%c0_13, %c0_14] : memref<64x128xf32, #tpu.memory_space<vmem>>, vector<64x128xf32>
    tpu.vector_store %arg4[%c0_13, %c0_14], %34 {strides = array<i32>} : memref<64x128xf32, #tpu.memory_space<vmem>>, vector<64x128xf32>,
    return
  }
  func.func @transform_0(%arg0: i32) -> (i32, i32) {
    %c0_i32 = arith.constant 0 : i32
    %c0_i32_0 = arith.constant 0 : i32
    return %arg0, %c0_i32 : i32, i32
  }
  func.func @transform_1(%arg0: i32) -> (i32, i32) {
    %c0_i32 = arith.constant 0 : i32
    %c0_i32_0 = arith.constant 0 : i32
    %c0_i32_1 = arith.constant 0 : i32
    return %c0_i32, %c0_i32_0 : i32, i32
  }
  func.func @transform_2(%arg0: i32) -> (i32, i32) {
    %c0_i32 = arith.constant 0 : i32
    %c0_i32_0 = arith.constant 0 : i32
    %c0_i32_1 = arith.constant 0 : i32
    return %c0_i32, %c0_i32_0 : i32, i32
  }
  func.func @transform_3(%arg0: i32) -> (i32, i32) {
    %c0_i32 = arith.constant 0 : i32
    %c0_i32_0 = arith.constant 0 : i32
    return %arg0, %c0_i32 : i32, i32
  }
}

</mosaic_0001>

<llo_original>
// kernel: tpu_custom_call.1
$region0: #{tpu_custom_call.1}
  #allocation0 [shape = 'u32[]', space=smem, size = 0x4, offset = 0x4, fixed_abs, tag = 'smem constant byte address 0x4 - core index']
  #allocation1 [shape = 'u32[72,128]{1,0:T(1,128)}', space=vmem, size = 0x9000, scoped, tag = 'internal scratch']
  %s0 = inlined_call_operand.vmem [shape: f32[200,32], index: 0, kind: input, shape index: {}]
  %s1 = inlined_call_operand.vmem [shape: f32[128,32], index: 1, kind: input, shape index: {}]
  %s2 = inlined_call_operand.vmem [shape: f32[1,128], index: 2, kind: input, shape index: {}]
  %s3 = inlined_call_operand.hbm [shape: f32[200,128], index: 3, kind: output, shape index: {}]
  %s4 = sld [smem:[#allocation0]]
  $region45: #{tpu_custom_call.1} parent=0
    _
  %s6 = ssub.s32 1, %s4
  %s7 = scalar_select 0, %s6, %s4
  $region1: #{tpu_custom_call.1} parent=0
    #allocation2 [shape = 'u8[65536]{0}', space=vmem, size = 0x10000, scoped, tag = 'output window, operand 0']
    #allocation3 [shape = 's32[2]{0}', space=sflag, size = 0x8, scoped, tag = 'scoped memory for tpu_custom_call.1']
    %8 = vsyncpa [#allocation3], 0
    %s9 = scalar_lea.sflag [#allocation3], 1
    %10 = vsyncpa %s9, 0
    loop: start=0, step=1, limit=6
    $region2: #{tpu_custom_call.1} parent=1 // loop_pre_header
      _
    $region3: #{tpu_custom_call.1} parent=1 // loop_header
      %s12 = sphi 0, %s16
      %p13 = scmp.ge.s32.totalorder %s12, 6
      %s22 = sphi 0, %s24
      %s25 = sphi 0, %s22
      %s26 = sphi 0, %s25
      %s42 = sphi 0, %s26
      %s46 = sphi 0, %s46
      %s48 = sphi 0, %s46
      %s49 = sphi 0, %s48
      %s63 = sphi 0, %s49
      %s67 = sphi 0, %s67
      %s69 = sphi 0, %s67
      %s70 = sphi 0, %s69
      %s84 = sphi 0, %s70
      %s90 = sphi 0, %s92
      %s93 = sphi 0, %s90
      %s94 = sphi 0, %s93
      %s110 = sphi 0, %s94
    $region4: #{tpu_custom_call.1} parent=1 // loop_header_branch
      %15 = sbr.rel (%p13) target = $region8
    $region5: #{tpu_custom_call.1} parent=1 // loop_body
      %s17 = ssub.s32 %s12, 1
      %s18 = ssub.s32 %s12, 2
      %s19 = sadd.s32 %s12, 1
      %s20 = ssub.s32 %s12, %s19
      %p21 = scmp.eq.s32.totalorder %s20, 0
      %s23 = sadd.s32 %s22, 1
      %s24 = scalar_select %p21, %s22, %s23
      %p27 = pneg %p21
      %p28 = scmp.eq.s32.totalorder %s12, 3
      %p29 = por %p27, %p28
      %p30 = scmp.ne.s32.totalorder %s22, %s25
      %p31 = scmp.eq.s32.totalorder %s12, 0
      %p32 = por %p30, %p31
      %p33 = scmp.ne.s32.totalorder %s22, %s25
      %p34 = scmp.eq.s32.totalorder %s17, 3
      %p35 = por %p33, %p34
      %p36 = scmp.ne.s32.totalorder %s25, %s26
      %p37 = scmp.eq.s32.totalorder %s17, 0
      %p38 = por %p36, %p37
      %p39 = scmp.ne.s32.totalorder %s25, %s26
      %p40 = scmp.eq.s32.totalorder %s18, 3
      %p41 = por %p39, %p40
      %p43 = scmp.ne.s32.totalorder %s26, %s42
      %p44 = scmp.eq.s32.totalorder %s18, 0
      %p45 = por %p43, %p44
      %s47 = sadd.s32 %s46, 1
      %p50 = scmp.eq.s32.totalorder %s12, 3
      %p51 = scmp.ne.s32.totalorder %s46, %s48
      %p52 = scmp.eq.s32.totalorder %s12, 0
      %p53 = por %p51, %p52
      %p54 = scmp.ne.s32.totalorder %s46, %s48
      %p55 = scmp.eq.s32.totalorder %s17, 3
      %p56 = por %p54, %p55
      %p57 = scmp.ne.s32.totalorder %s48, %s49
      %p58 = scmp.eq.s32.totalorder %s17, 0
      %p59 = por %p57, %p58
      %p60 = scmp.ne.s32.totalorder %s48, %s49
      %p61 = scmp.eq.s32.totalorder %s18, 3
      %p62 = por %p60, %p61
      %p64 = scmp.ne.s32.totalorder %s49, %s63
      %p65 = scmp.eq.s32.totalorder %s18, 0
      %p66 = por %p64, %p65
      %s68 = sadd.s32 %s67, 1
      %p71 = scmp.eq.s32.totalorder %s12, 3
      %p72 = scmp.ne.s32.totalorder %s67, %s69
      %p73 = scmp.eq.s32.totalorder %s12, 0
      %p74 = por %p72, %p73
      %p75 = scmp.ne.s32.totalorder %s67, %s69
      %p76 = scmp.eq.s32.totalorder %s17, 3
      %p77 = por %p75, %p76
      %p78 = scmp.ne.s32.totalorder %s69, %s70
      %p79 = scmp.eq.s32.totalorder %s17, 0
      %p80 = por %p78, %p79
      %p81 = scmp.ne.s32.totalorder %s69, %s70
      %p82 = scmp.eq.s32.totalorder %s18, 3
      %p83 = por %p81, %p82
      %p85 = scmp.ne.s32.totalorder %s70, %s84
      %p86 = scmp.eq.s32.totalorder %s18, 0
      %p87 = por %p85, %p86
      %s88 = ssub.s32 %s12, %s19
      %p89 = scmp.eq.s32.totalorder %s88, 0
      %s91 = sadd.s32 %s90, 1
      %s92 = scalar_select %p89, %s90, %s91
      %p95 = pneg %p89
      %p96 = scmp.eq.s32.totalorder %s12, 3
      %p97 = por %p95, %p96
      %p98 = scmp.ne.s32.totalorder %s90, %s93
      %p99 = scmp.eq.s32.totalorder %s12, 0
      %p100 = por %p98, %p99
      %p101 = scmp.ne.s32.totalorder %s90, %s93
      %p102 = scmp.eq.s32.totalorder %s17, 3
      %p103 = por %p101, %p102
      %p104 = scmp.ne.s32.totalorder %s93, %s94
      %p105 = scmp.eq.s32.totalorder %s17, 0
      %p106 = por %p104, %p105
      %p107 = scmp.ne.s32.totalorder %s93, %s94
      %p108 = scmp.eq.s32.totalorder %s18, 3
      %p109 = por %p107, %p108
      %p111 = scmp.ne.s32.totalorder %s94, %s110
      %p112 = scmp.eq.s32.totalorder %s18, 0
      %p113 = por %p111, %p112
      %p114 = scmp.le.s32.totalorder 1, %s12
      %p115 = scmp.lt.s32.totalorder %s12, 5
      %p116 = pnand %p114, %p115
      %p117 = pneg %p116
      // Predicated region
      $region9: #{tpu_custom_call.1} parent=5 // pred_check
        _
      $region10: #{tpu_custom_call.1} parent=5 // pred_check_branch
        %119 = sbr.rel (%p116) target = $region12
      $region11: #{tpu_custom_call.1} parent=5 // pred_region
        %s120 = ssub.s32 %s12, 1
        // Predicated region
        $region13: #{tpu_custom_call.1} parent=11 // pred_check
          %p121 = pneg %p59
        $region14: #{tpu_custom_call.1} parent=11 // pred_check_branch
          %123 = sbr.rel (%p121) target = $region16
        $region15: #{tpu_custom_call.1} parent=11 // pred_region
          _
        $region16: #{tpu_custom_call.1} parent=11 // pred_fallthru
          _
        // Predicated region
        $region17: #{tpu_custom_call.1} parent=11 // pred_check
          %p124 = pneg %p80
        $region18: #{tpu_custom_call.1} parent=11 // pred_check_branch
          %126 = sbr.rel (%p124) target = $region20
        $region19: #{tpu_custom_call.1} parent=11 // pred_region
          _
        $region20: #{tpu_custom_call.1} parent=11 // pred_fallthru
          _
      $region12: #{tpu_custom_call.1} parent=5 // pred_fallthru
        _
      %p127 = scmp.lt.s32.totalorder %s12, 4
      // Predicated region
      $region21: #{tpu_custom_call.1} parent=5 // pred_check
        %p128 = pneg %p127
      $region22: #{tpu_custom_call.1} parent=5 // pred_check_branch
        %130 = sbr.rel (%p128) target = $region24
      $region23: #{tpu_custom_call.1} parent=5 // pred_region
        // Predicated region
        $region25: #{tpu_custom_call.1} parent=23 // pred_check
          %p131 = pneg %p32
        $region26: #{tpu_custom_call.1} parent=23 // pred_check_branch
          %133 = sbr.rel (%p131) target = $region28
        $region27: #{tpu_custom_call.1} parent=23 // pred_region
          %s134 = smul.u32 8, %s12
          %s135 = ssub.s32 25, %s134
          %p136 = scmp.lt.s32.totalorder %s135, 8
          %s137 = scalar_select %p136, %s135, 8
          %s138 = smul.u32 8, %s137
          %p139 = scmp.lt.s32.totalorder %s134, 24
          %s140 = scalar_select %p139, %s134, 24
          %s141 = smul.addr %s140, 8
          %s142 = scalar_lea.vmem %s0, %s141
          %s143 = smul.u32 8, %s12
          %s144 = ssub.s32 25, %s143
          %p145 = scmp.lt.s32.totalorder %s144, 8
          %s146 = scalar_select %p145, %s144, 8
          %s147 = smul.u32 8, %s146
        $region28: #{tpu_custom_call.1} parent=23 // pred_fallthru
          _
      $region24: #{tpu_custom_call.1} parent=5 // pred_fallthru
        _
      %p148 = scmp.le.s32.totalorder 1, %s12
      %p149 = scmp.lt.s32.totalorder %s12, 5
      %p150 = pnand %p148, %p149
      %p151 = pneg %p150
      // Predicated region
      $region29: #{tpu_custom_call.1} parent=5 // pred_check
        _
      $region30: #{tpu_custom_call.1} parent=5 // pred_check_branch
        %153 = sbr.rel (%p150) target = $region32
      $region31: #{tpu_custom_call.1} parent=5 // pred_region
        %s154 = ssub.s32 %s12, 1
        %s155 = smul.u32 8, %s17
        %s156 = ssub.s32 25, %s155
        %p157 = scmp.lt.s32.totalorder %s156, 8
        %s158 = scalar_select %p157, %s156, 8
        %s159 = smul.u32 8, %s158
        %p160 = scmp.lt.s32.totalorder %s155, 24
        %s161 = scalar_select %p160, %s155, 24
        %s162 = smul.addr %s161, 8
        %s163 = scalar_lea.vmem %s0, %s162
        %p164 = pneg %p38
        %p165 = pneg %p35
        %p166 = pneg %p59
        %p167 = pneg %p56
        %p168 = pneg %p80
        %p169 = pneg %p77
        %p170 = pneg %p106
        %p171 = pneg %p103
        %s172 = sand.u32 %s93, 1
        %s173 = scalar_lea.sflag [#allocation3], %s172
        %s174 = sand.u32 %s93, 1
        %s175 = smul.addr %s174, 64
        %s176 = scalar_lea.vmem [#allocation2], %s175
        %s177 = smul.u32 8, %s17
        %s178 = ssub.s32 25, %s177
        %p179 = scmp.lt.s32.totalorder %s178, 8
        %s180 = scalar_select %p179, %s178, 8
        %s181 = smul.u32 8, %s180
        %p182 = scmp.lt.s32.totalorder %s177, 24
        %s183 = scalar_select %p182, %s177, 24
        %s184 = smul.addr %s183, 8
        %s185 = scalar_lea.vmem %s0, %s184
        %s186 = smul.u32 8, %s17
        %s187 = ssub.s32 25, %s186
        %p188 = scmp.lt.s32.totalorder %s187, 8
        %s189 = scalar_select %p188, %s187, 8
        %s190 = smul.u32 8, %s189
        %s191 = smul.u32 8, %s17
        %s192 = ssub.s32 25, %s191
        %p193 = scmp.lt.s32.totalorder %s192, 8
        %s194 = scalar_select %p193, %s192, 8
        %s195 = smul.u32 8, %s194
        %v196 = vld [vmem:[%s185] sm:$0xff]
        %v197 = vld [vmem:[%s185 + $0x8] sm:$0xff]
        %v198 = vld [vmem:[%s185 + $0x10] sm:$0xff]
        %v199 = vld [vmem:[%s185 + $0x18] sm:$0xff]
        %v200 = vld [vmem:[%s185 + $0x20] sm:$0xff]
        %v201 = vld [vmem:[%s185 + $0x28] sm:$0xff]
        %v202 = vld [vmem:[%s185 + $0x30] sm:$0xff]
        %v203 = vld [vmem:[%s185 + $0x38] sm:$0xff]
        %v204 = vld [vmem:[%s1] sm:$0xff]
        %v205 = vld [vmem:[%s1 + $0x8] sm:$0xff]
        %v206 = vld [vmem:[%s1 + $0x10] sm:$0xff]
        %v207 = vld [vmem:[%s1 + $0x18] sm:$0xff]
        %v208 = vld [vmem:[%s1 + $0x20] sm:$0xff]
        %v209 = vld [vmem:[%s1 + $0x28] sm:$0xff]
        %v210 = vld [vmem:[%s1 + $0x30] sm:$0xff]
        %v211 = vld [vmem:[%s1 + $0x38] sm:$0xff]
        %v212 = vld [vmem:[%s1 + $0x40] sm:$0xff]
        %v213 = vld [vmem:[%s1 + $0x48] sm:$0xff]
        %v214 = vld [vmem:[%s1 + $0x50] sm:$0xff]
        %v215 = vld [vmem:[%s1 + $0x58] sm:$0xff]
        %v216 = vld [vmem:[%s1 + $0x60] sm:$0xff]
        %v217 = vld [vmem:[%s1 + $0x68] sm:$0xff]
        %v218 = vld [vmem:[%s1 + $0x70] sm:$0xff]
        %v219 = vld [vmem:[%s1 + $0x78] sm:$0xff]
        %v220 = vld [vmem:[%s2] sm:$0x1]
        %v221 = vpack.c.bf16 %v197, %v196
        %v222 = vpack.c.bf16 %v199, %v198
        %v223 = vpack.c.bf16 %v201, %v200
        %v224 = vpack.c.bf16 %v203, %v202
        %v225 = vpack.c.bf16 %v205, %v204
        %v226 = vpack.c.bf16 %v207, %v206
        %v227 = vpack.c.bf16 %v209, %v208
        %v228 = vpack.c.bf16 %v211, %v210
        %v229 = vpack.c.bf16 %v213, %v212
        %v230 = vpack.c.bf16 %v215, %v214
        %v231 = vpack.c.bf16 %v217, %v216
        %v232 = vpack.c.bf16 %v219, %v218
        %vm233 = vcmask 261120
        %v235 = vsel %vm233, %v221, 0
        %v238 = vsel %vm233, %v222, 0
        %v241 = vsel %vm233, %v223, 0
        %v244 = vsel %vm233, %v224, 0
        %v247 = vsel %vm233, %v225, 0
        %v250 = vsel %vm233, %v226, 0
        %v253 = vsel %vm233, %v227, 0
        %v256 = vsel %vm233, %v228, 0
        %v259 = vsel %vm233, %v229, 0
        %v262 = vsel %vm233, %v230, 0
        %v265 = vsel %vm233, %v231, 0
        %v268 = vsel %vm233, %v232, 0
        %270 = vmatpush.bf16.xpose.msra.mxu0 %v268
        %271 = vmatpush.bf16.xpose.msra.mxu0 %v265
        %272 = vmatpush.bf16.xpose.msra.mxu0 %v262
        %273 = vmatpush.bf16.xpose.msra.mxu0 %v259
        %274 = vmatpush.bf16.xpose.msra.mxu0 %v256
        %275 = vmatpush.bf16.xpose.msra.mxu0 %v253
        %276 = vmatpush.bf16.xpose.msra.mxu0 %v250
        %277 = vmatpush.bf16.xpose.msra.mxu0 %v247
        %278 = vmatmul.bf16.gmra.mxu0 %v235
        %v279 = vpop.f32.mrf.mxu0
        %v280 = vadd.f32 0.0, %v279
        %v281 = vpop.f32.mrf.mxu0
        %v282 = vadd.f32 0.0, %v281
        %283 = vmatmul.bf16.gmra.mxu0 %v238
        %v284 = vpop.f32.mrf.mxu0
        %v285 = vadd.f32 0.0, %v284
        %v286 = vpop.f32.mrf.mxu0
        %v287 = vadd.f32 0.0, %v286
        %288 = vmatmul.bf16.gmra.mxu0 %v241
        %v289 = vpop.f32.mrf.mxu0
        %v290 = vadd.f32 0.0, %v289
        %v291 = vpop.f32.mrf.mxu0
        %v292 = vadd.f32 0.0, %v291
        %293 = vmatmul.bf16.gmra.mxu0 %v244
        %v294 = vpop.f32.mrf.mxu0
        %v295 = vadd.f32 0.0, %v294
        %v296 = vpop.f32.mrf.mxu0
        %v297 = vadd.f32 0.0, %v296
        %298 = vdwg.mxu0
        %v299 = vmul.f32 %v196, %v196
        %v300 = vmul.f32 %v197, %v197
        %v301 = vmul.f32 %v198, %v198
        %v302 = vmul.f32 %v199, %v199
        %v303 = vmul.f32 %v200, %v200
        %v304 = vmul.f32 %v201, %v201
        %v305 = vmul.f32 %v202, %v202
        %v306 = vmul.f32 %v203, %v203
        %v307 = vsel %vm233, %v299, 0.0
        %308 = vadd.xlane.f32.xlu0 %v307
        %v309 = vpop.xlane.xlu0 %308
        %v310 = vsel %vm233, %v300, 0.0
        %311 = vadd.xlane.f32.xlu0 %v310
        %v312 = vpop.xlane.xlu0 %311
        %v313 = vsel %vm233, %v301, 0.0
        %314 = vadd.xlane.f32.xlu0 %v313
        %v315 = vpop.xlane.xlu0 %314
        %v316 = vsel %vm233, %v302, 0.0
        %317 = vadd.xlane.f32.xlu0 %v316
        %v318 = vpop.xlane.xlu0 %317
        %v319 = vsel %vm233, %v303, 0.0
        %320 = vadd.xlane.f32.xlu0 %v319
        %v321 = vpop.xlane.xlu0 %320
        %v322 = vsel %vm233, %v304, 0.0
        %323 = vadd.xlane.f32.xlu0 %v322
        %v324 = vpop.xlane.xlu0 %323
        %v325 = vsel %vm233, %v305, 0.0
        %326 = vadd.xlane.f32.xlu0 %v325
        %v327 = vpop.xlane.xlu0 %326
        %v328 = vsel %vm233, %v306, 0.0
        %329 = vadd.xlane.f32.xlu0 %v328
        %v330 = vpop.xlane.xlu0 %329
        %v332 = vperm.slane %v220, 0
        %v334 = vadd.f32 %v309, %v332
        %v335 = vadd.f32 %v312, %v332
        %v336 = vadd.f32 %v315, %v332
        %v337 = vadd.f32 %v318, %v332
        %v338 = vadd.f32 %v321, %v332
        %v339 = vadd.f32 %v324, %v332
        %v340 = vadd.f32 %v327, %v332
        %v341 = vadd.f32 %v330, %v332
        %v342 = vmul.f32 %v280, 2.0
        %v343 = vmul.f32 %v282, 2.0
        %v344 = vmul.f32 %v285, 2.0
        %v345 = vmul.f32 %v287, 2.0
        %v346 = vmul.f32 %v290, 2.0
        %v347 = vmul.f32 %v292, 2.0
        %v348 = vmul.f32 %v295, 2.0
        %v349 = vmul.f32 %v297, 2.0
        %v350 = vsub.f32 %v334, %v342
        %v351 = vsub.f32 %v335, %v343
        %v352 = vsub.f32 %v336, %v344
        %v353 = vsub.f32 %v337, %v345
        %v354 = vsub.f32 %v338, %v346
        %v355 = vsub.f32 %v339, %v347
        %v356 = vsub.f32 %v340, %v348
        %v357 = vsub.f32 %v341, %v349
        %v358 = vmax.f32 %v350, 0.0
        %v359 = vmax.f32 %v351, 0.0
        %v360 = vmax.f32 %v352, 0.0
        %v361 = vmax.f32 %v353, 0.0
        %v362 = vmax.f32 %v354, 0.0
        %v363 = vmax.f32 %v355, 0.0
        %v364 = vmax.f32 %v356, 0.0
        %v365 = vmax.f32 %v357, 0.0
        %v366 = vadd.f32 %v358, 1.0
        %v367 = vadd.f32 %v359, 1.0
        %v368 = vadd.f32 %v360, 1.0
        %v369 = vadd.f32 %v361, 1.0
        %v370 = vadd.f32 %v362, 1.0
        %v371 = vadd.f32 %v363, 1.0
        %v372 = vadd.f32 %v364, 1.0
        %v373 = vadd.f32 %v365, 1.0
        %v374 = vrcp.pop %v366
        %v375 = vrcp.pop %v367
        %v376 = vrcp.pop %v368
        %v377 = vrcp.pop %v369
        %v378 = vrcp.pop %v370
        %v379 = vrcp.pop %v371
        %v380 = vrcp.pop %v372
        %v381 = vrcp.pop %v373
        %v382 = vlaneseq
        %v383 = vand.u32 %v382, 127
        %vm384 = vcmp.lt.s32.totalorder %v383, 16
        %v385 = vsel %vm384, 1, 0
        %vm386 = vcmp.eq.s32.totalorder %v385, 1
        %v387 = vsel %vm386, %v374, 0.0
        %v388 = vsel %vm386, %v375, 0.0
        %v389 = vsel %vm386, %v376, 0.0
        %v390 = vsel %vm386, %v377, 0.0
        %v391 = vsel %vm386, %v378, 0.0
        %v392 = vsel %vm386, %v379, 0.0
        %v393 = vsel %vm386, %v380, 0.0
        %v394 = vsel %vm386, %v381, 0.0
        %395 = vadd.xlane.f32.xlu0 %v387
        %v396 = vpop.xlane.xlu0 %395
        %397 = vadd.xlane.f32.xlu0 %v388
        %v398 = vpop.xlane.xlu0 %397
        %399 = vadd.xlane.f32.xlu0 %v389
        %v400 = vpop.xlane.xlu0 %399
        %401 = vadd.xlane.f32.xlu0 %v390
        %v402 = vpop.xlane.xlu0 %401
        %403 = vadd.xlane.f32.xlu0 %v391
        %v404 = vpop.xlane.xlu0 %403
        %405 = vadd.xlane.f32.xlu0 %v392
        %v406 = vpop.xlane.xlu0 %405
        %407 = vadd.xlane.f32.xlu0 %v393
        %v408 = vpop.xlane.xlu0 %407
        %409 = vadd.xlane.f32.xlu0 %v394
        %v410 = vpop.xlane.xlu0 %409
        %v411 = vrcp.pop %v396
        %v412 = vmul.f32 %v396, %v411
        %v413 = vsub.f32 1.0, %v412
        %v414 = vmul.f32 %v411, %v413
        %v415 = vadd.f32 %v411, %v414
        %vm416 = vweird.f32 %v396
        %vm417 = vweird.f32 %v411
        %vm418 = vmor %vm416, %vm417
        %v419 = vsel %vm418, %v411, %v415
        %v420 = vand.u32 2147483647, %v396
        %vm421 = vcmp.eq.f32.partialorder %v420, 8.507059e+37
        %v422 = vand.u32 %v396, 2147483648
        %v423 = vor.u32 1.1754944e-38, %v422
        %v424 = vsel %vm421, %v423, %v419
        %v425 = vmul.f32 1.0, %v424
        %v426 = vrcp.pop %v398
        %v427 = vmul.f32 %v398, %v426
        %v428 = vsub.f32 1.0, %v427
        %v429 = vmul.f32 %v426, %v428
        %v430 = vadd.f32 %v426, %v429
        %vm431 = vweird.f32 %v398
        %vm432 = vweird.f32 %v426
        %vm433 = vmor %vm431, %vm432
        %v434 = vsel %vm433, %v426, %v430
        %v435 = vand.u32 2147483647, %v398
        %vm436 = vcmp.eq.f32.partialorder %v435, 8.507059e+37
        %v437 = vand.u32 %v398, 2147483648
        %v438 = vor.u32 1.1754944e-38, %v437
        %v439 = vsel %vm436, %v438, %v434
        %v440 = vmul.f32 1.0, %v439
        %v441 = vrcp.pop %v400
        %v442 = vmul.f32 %v400, %v441
        %v443 = vsub.f32 1.0, %v442
        %v444 = vmul.f32 %v441, %v443
        %v445 = vadd.f32 %v441, %v444
        %vm446 = vweird.f32 %v400
        %vm447 = vweird.f32 %v441
        %vm448 = vmor %vm446, %vm447
        %v449 = vsel %vm448, %v441, %v445
        %v450 = vand.u32 2147483647, %v400
        %vm451 = vcmp.eq.f32.partialorder %v450, 8.507059e+37
        %v452 = vand.u32 %v400, 2147483648
        %v453 = vor.u32 1.1754944e-38, %v452
        %v454 = vsel %vm451, %v453, %v449
        %v455 = vmul.f32 1.0, %v454
        %v456 = vrcp.pop %v402
        %v457 = vmul.f32 %v402, %v456
        %v458 = vsub.f32 1.0, %v457
        %v459 = vmul.f32 %v456, %v458
        %v460 = vadd.f32 %v456, %v459
        %vm461 = vweird.f32 %v402
        %vm462 = vweird.f32 %v456
        %vm463 = vmor %vm461, %vm462
        %v464 = vsel %vm463, %v456, %v460
        %v465 = vand.u32 2147483647, %v402
        %vm466 = vcmp.eq.f32.partialorder %v465, 8.507059e+37
        %v467 = vand.u32 %v402, 2147483648
        %v468 = vor.u32 1.1754944e-38, %v467
        %v469 = vsel %vm466, %v468, %v464
        %v470 = vmul.f32 1.0, %v469
        %v471 = vrcp.pop %v404
        %v472 = vmul.f32 %v404, %v471
        %v473 = vsub.f32 1.0, %v472
        %v474 = vmul.f32 %v471, %v473
        %v475 = vadd.f32 %v471, %v474
        %vm476 = vweird.f32 %v404
        %vm477 = vweird.f32 %v471
        %vm478 = vmor %vm476, %vm477
        %v479 = vsel %vm478, %v471, %v475
        %v480 = vand.u32 2147483647, %v404
        %vm481 = vcmp.eq.f32.partialorder %v480, 8.507059e+37
        %v482 = vand.u32 %v404, 2147483648
        %v483 = vor.u32 1.1754944e-38, %v482
        %v484 = vsel %vm481, %v483, %v479
        %v485 = vmul.f32 1.0, %v484
        %v486 = vrcp.pop %v406
        %v487 = vmul.f32 %v406, %v486
        %v488 = vsub.f32 1.0, %v487
        %v489 = vmul.f32 %v486, %v488
        %v490 = vadd.f32 %v486, %v489
        %vm491 = vweird.f32 %v406
        %vm492 = vweird.f32 %v486
        %vm493 = vmor %vm491, %vm492
        %v494 = vsel %vm493, %v486, %v490
        %v495 = vand.u32 2147483647, %v406
        %vm496 = vcmp.eq.f32.partialorder %v495, 8.507059e+37
        %v497 = vand.u32 %v406, 2147483648
        %v498 = vor.u32 1.1754944e-38, %v497
        %v499 = vsel %vm496, %v498, %v494
        %v500 = vmul.f32 1.0, %v499
        %v501 = vrcp.pop %v408
        %v502 = vmul.f32 %v408, %v501
        %v503 = vsub.f32 1.0, %v502
        %v504 = vmul.f32 %v501, %v503
        %v505 = vadd.f32 %v501, %v504
        %vm506 = vweird.f32 %v408
        %vm507 = vweird.f32 %v501
        %vm508 = vmor %vm506, %vm507
        %v509 = vsel %vm508, %v501, %v505
        %v510 = vand.u32 2147483647, %v408
        %vm511 = vcmp.eq.f32.partialorder %v510, 8.507059e+37
        %v512 = vand.u32 %v408, 2147483648
        %v513 = vor.u32 1.1754944e-38, %v512
        %v514 = vsel %vm511, %v513, %v509
        %v515 = vmul.f32 1.0, %v514
        %v516 = vrcp.pop %v410
        %v517 = vmul.f32 %v410, %v516
        %v518 = vsub.f32 1.0, %v517
        %v519 = vmul.f32 %v516, %v518
        %v520 = vadd.f32 %v516, %v519
        %vm521 = vweird.f32 %v410
        %vm522 = vweird.f32 %v516
        %vm523 = vmor %vm521, %vm522
        %v524 = vsel %vm523, %v516, %v520
        %v525 = vand.u32 2147483647, %v410
        %vm526 = vcmp.eq.f32.partialorder %v525, 8.507059e+37
        %v527 = vand.u32 %v410, 2147483648
        %v528 = vor.u32 1.1754944e-38, %v527
        %v529 = vsel %vm526, %v528, %v524
        %v530 = vmul.f32 1.0, %v529
        %v531 = vmul.f32 %v387, %v425
        %v532 = vmul.f32 %v388, %v440
        %v533 = vmul.f32 %v389, %v455
        %v534 = vmul.f32 %v390, %v470
        %v535 = vmul.f32 %v391, %v485
        %v536 = vmul.f32 %v392, %v500
        %v537 = vmul.f32 %v393, %v515
        %v538 = vmul.f32 %v394, %v530
        %539 = vst [vmem:[%s176] sm:$0xff] %v531
        %540 = vst [vmem:[%s176 + $0x8] sm:$0xff] %v532
        %541 = vst [vmem:[%s176 + $0x10] sm:$0xff] %v533
        %542 = vst [vmem:[%s176 + $0x18] sm:$0xff] %v534
        %543 = vst [vmem:[%s176 + $0x20] sm:$0xff] %v535
        %544 = vst [vmem:[%s176 + $0x28] sm:$0xff] %v536
        %545 = vst [vmem:[%s176 + $0x30] sm:$0xff] %v537
        %546 = vst [vmem:[%s176 + $0x38] sm:$0xff] %v538
        %s547 = sand.u32 %s93, 1
        %s548 = scalar_lea.sflag [#allocation3], %s547
        %s549 = sand.u32 %s93, 1
        %s550 = smul.addr %s549, 64
        %s551 = scalar_lea.vmem [#allocation2], %s550
        // Predicated region
        $region33: #{tpu_custom_call.1} parent=31 // pred_check
          %p552 = pneg %p103
        $region34: #{tpu_custom_call.1} parent=31 // pred_check_branch
          %554 = sbr.rel (%p552) target = $region36
        $region35: #{tpu_custom_call.1} parent=31 // pred_region
          %s555 = smul.u32 8, %s17
          %s556 = ssub.s32 25, %s555
          %p557 = scmp.lt.s32.totalorder %s556, 8
          %s558 = scalar_select %p557, %s556, 8
          %s559 = smul.u32 8, %s558
          %s560 = ssub.s32 64, %s559
          %s561 = sshll.u32 %s560, 4
          %562 = vsyncadd %s548, %s561
          %p563 = scmp.ne.s32.totalorder 0, %s559
          %s564 = smul.addr %s555, 8
          %s565 = scalar_lea.hbm %s3, %s564
          %s566 = smul.u32 8, %s558
          %s567 = sshll.u32 %s551, 4
          %s568 = int_to_ptr.vmem [resolvable:$true] %s567
          %s569 = sshll.u32 %s565, 4
          %s570 = int_to_ptr.hbm [resolvable:$true] %s569
          %s571 = sshll.u32 %s566, 4
          %575 = dma.vmem_to_hbm [thread:$0]  (%p563), %s568, %s571, %s570, %s548, 128, 128, 8
        $region36: #{tpu_custom_call.1} parent=31 // pred_fallthru
          _
      $region32: #{tpu_custom_call.1} parent=5 // pred_fallthru
        _
      %p576 = scmp.le.s32.totalorder 2, %s12
      // Predicated region
      $region37: #{tpu_custom_call.1} parent=5 // pred_check
        %p577 = pneg %p576
      $region38: #{tpu_custom_call.1} parent=5 // pred_check_branch
        %579 = sbr.rel (%p577) target = $region40
      $region39: #{tpu_custom_call.1} parent=5 // pred_region
        %s580 = ssub.s32 %s12, 2
        // Predicated region
        $region41: #{tpu_custom_call.1} parent=39 // pred_check
          %p581 = pneg %p109
        $region42: #{tpu_custom_call.1} parent=39 // pred_check_branch
          %583 = sbr.rel (%p581) target = $region44
        $region43: #{tpu_custom_call.1} parent=39 // pred_region
          %s584 = sand.u32 %s94, 1
          %s585 = scalar_lea.sflag [#allocation3], %s584
          %s586 = sand.u32 %s94, 1
          %s587 = smul.addr %s586, 64
          %s588 = scalar_lea.vmem [#allocation2], %s587
          %590 = dma.done %s585, 1024
        $region44: #{tpu_custom_call.1} parent=39 // pred_fallthru
          _
      $region40: #{tpu_custom_call.1} parent=5 // pred_fallthru
        _
    $region6: #{tpu_custom_call.1} parent=1 // loop_footer
      %s16 = sadd.s32 1, %s12
    $region7: #{tpu_custom_call.1} parent=1 // loop_footer_branch
      %11 = sbr.rel target = $region3
    $region8: #{tpu_custom_call.1} parent=1 // loop_exit
      _
    %591 = vsyncpa [#allocation3], 1
    %s592 = scalar_lea.sflag [#allocation3], 1
    %593 = vsyncpa %s592, 1

</llo_original>
